<compile_context>
chip_gen: v6e
topology: v6e:2x2x1
jax: 0.10.0
libtpu: 0.0.40
codegen_flags: <defaults>
</compile_context>

<pallas_src>
import functools

import jax
import jax.numpy as jnp
from jax.experimental import pallas as pl
from jax.experimental.pallas import tpu as pltpu

LN_EPS = 1e-5  # PyTorch nn.LayerNorm default


def _layernorm(x, gamma, beta):
    mu = jnp.mean(x, axis=-1, keepdims=True)
    var = jnp.mean(jnp.square(x - mu), axis=-1, keepdims=True)
    return (x - mu) * jax.lax.rsqrt(var + LN_EPS) * gamma + beta


def _gelu_exact(x):
    # PyTorch nn.GELU() default: exact erf formulation (kept for semantics;
    # tanh-approx would move the transcendental to the EUP slot on v6e/v7x).
    return 0.5 * x * (1.0 + jax.lax.erf(x * (1.0 / jnp.sqrt(2.0).astype(x.dtype))))


def greaselm_mlp_kernel(lm_ref, gnn_ref,
                        w1a_ref, w1b_ref, b1_ref, g1_ref, be1_ref,
                        w2_ref, b2_ref, g2_ref, be2_ref, o_ref):
    # In-kernel bf16 cast of the activation tiles (cheap VALU work hidden
    # under the MXU; avoids a separate HBM cast pass in the wrapper).
    lm = lm_ref[...].astype(jnp.bfloat16)
    gnn = gnn_ref[...].astype(jnp.bfloat16)
    # First Linear over the (virtual) concat [lm | gnn]: split-W1 form.
    # bf16 operands on the MXU, f32 accumulation.
    h = jnp.dot(lm, w1a_ref[...], preferred_element_type=jnp.float32)
    h = h + jnp.dot(gnn, w1b_ref[...], preferred_element_type=jnp.float32)
    h = h + b1_ref[...]
    # GELU (exact erf) + LayerNorm(hidden), in f32.
    h = _gelu_exact(h)
    h = _layernorm(h, g1_ref[...], be1_ref[...])
    # Second Linear (bf16 MXU, f32 accumulation) + LayerNorm(out).
    y = jnp.dot(h.astype(jnp.bfloat16), w2_ref[...],
                preferred_element_type=jnp.float32)
    y = y + b2_ref[...]
    y = _layernorm(y, g2_ref[...], be2_ref[...])
    o_ref[...] = y.astype(o_ref.dtype)


def _round_up(n, m):
    return (n + m - 1) // m * m


@functools.cache
def _buffered_single_ok():
    """True if pipeline_mode=pl.Buffered(1) constructs, lowers and runs."""
    try:
        const_spec = pl.BlockSpec((8, 128), lambda i: (0, 0),
                                  pipeline_mode=pl.Buffered(1))
    except Exception:
        return False
    try:
        def k(w_ref, x_ref, o_ref):
            o_ref[...] = x_ref[...] + w_ref[...]
        f = pl.pallas_call(
            k,
            out_shape=jax.ShapeDtypeStruct((16, 128), jnp.float32),
            grid_spec=pltpu.PrefetchScalarGridSpec(
                num_scalar_prefetch=0,
                grid=(2,),
                in_specs=[const_spec,
                          pl.BlockSpec((8, 128), lambda i: (i, 0))],
                out_specs=pl.BlockSpec((8, 128), lambda i: (i, 0))),
        )
        jax.block_until_ready(f(jnp.zeros((8, 128), jnp.float32),
                                jnp.ones((16, 128), jnp.float32)))
        return True
    except Exception:
        return False


def _vmem_capacity_bytes():
    try:
        return int(pltpu.get_tpu_info().vmem_capacity_bytes)
    except Exception:
        return 64 << 20  # conservative: v7x per-TC capacity


def _choose_row_tile(n_rows, row_tile):
    # bf16 native tile is (16, 128): keep the row tile a multiple of 16.
    row_tile = _round_up(max(16, row_tile), 16)
    # v7x has 2 TensorCores: prefer >= 2 grid steps when there are enough rows.
    if n_rows >= 32:
        row_tile = min(row_tile, _round_up((n_rows + 1) // 2, 16))
    # Never exceed the (16-padded) row count.
    row_tile = min(row_tile, _round_up(n_rows, 16))
    return row_tile


def greaselm_mlp(lm2d, gnn2d, w1, b1, g1, be1, w2, b2, g2, be2, *, row_tile=256):
    """lm2d, gnn2d: [N, D] -> [N, out_dim] via the fused (concat+MLP) kernel."""
    n_rows, d = lm2d.shape
    in_dim, hidden_dim = w1.shape
    out_dim = w2.shape[1]
    assert in_dim == 2 * d, (in_dim, d)

    row_tile = _choose_row_tile(n_rows, row_tile)
    grid = (pl.cdiv(n_rows, row_tile),)

    # bf16 weights for the MXU (resident, single-buffered).  Activations stay
    # in their producer dtype and are cast to bf16 inside the kernel.
    w1a = w1[:d].astype(jnp.bfloat16)
    w1b = w1[d:].astype(jnp.bfloat16)
    w2b = w2.astype(jnp.bfloat16)

    # Keep f32 output to match the PyTorch module; emit bf16 downstream if
    # tolerated to halve writeback DMA bytes.
    out_dtype = jnp.float32

    single_buffer_weights = _buffered_single_ok()
    w_buf = 1 if single_buffer_weights else 2
    in_itemsize = jnp.dtype(lm2d.dtype).itemsize

    # VMEM footprint estimate: streamed tiles (double-buffered), resident
    # weights/params (x w_buf), plus the in-kernel activation chain
    # (bf16 input copies, f32 h, bf16 h copy, f32 y).
    vmem_est = (
        2 * (2 * row_tile * d * in_itemsize)                        # lm+gnn tiles
        + 2 * (row_tile * out_dim * 4)                              # output tile
        + w_buf * (2 * d * hidden_dim + hidden_dim * out_dim) * 2   # bf16 weights
        + w_buf * 4 * (3 * hidden_dim + 3 * out_dim)                # biases / LN params
        + row_tile * (2 * d) * 2                                    # bf16 lm/gnn casts
        + row_tile * hidden_dim * (4 + 2)                           # f32 h + bf16 copy
        + row_tile * out_dim * 4                                    # f32 y
    )
    cap = int(0.9 * _vmem_capacity_bytes())                         # leave compiler headroom
    vmem_limit = min(max(int(1.25 * vmem_est) + (4 << 20), 16 << 20), cap)

    def const_spec(shape):
        idx = lambda i: (0,) * len(shape)
        if single_buffer_weights:
            return pl.BlockSpec(shape, idx, pipeline_mode=pl.Buffered(1))
        return pl.BlockSpec(shape, idx)

    grid_spec = pltpu.PrefetchScalarGridSpec(
        num_scalar_prefetch=0,
        grid=grid,
        in_specs=[
            pl.BlockSpec((row_tile, d), lambda i: (i, 0)),   # lm tile
            pl.BlockSpec((row_tile, d), lambda i: (i, 0)),   # gnn tile
            const_spec((d, hidden_dim)),                     # W1[:D]
            const_spec((d, hidden_dim)),                     # W1[D:]
            const_spec((1, hidden_dim)),                     # b1
            const_spec((1, hidden_dim)),                     # gamma1
            const_spec((1, hidden_dim)),                     # beta1
            const_spec((hidden_dim, out_dim)),               # W2
            const_spec((1, out_dim)),                        # b2
            const_spec((1, out_dim)),                        # gamma2
            const_spec((1, out_dim)),                        # beta2
        ],
        out_specs=pl.BlockSpec((row_tile, out_dim), lambda i: (i, 0)),
    )

    return pl.pallas_call(
        greaselm_mlp_kernel,
        out_shape=jax.ShapeDtypeStruct((n_rows, out_dim), out_dtype),
        grid_spec=grid_spec,
        compiler_params=pltpu.CompilerParams(
            dimension_semantics=("parallel",),
            vmem_limit_bytes=vmem_limit,
        ),
    )(lm2d, gnn2d, w1a, w1b, b1, g1, be1, w2b, b2, g2, be2)


def greaselm_layer_forward(x, params, *, row_tile=256):
    """Full GreaseLMLayer forward: LM(x), GNN(x), fused concat+MLP kernel."""
    B, S, D = x.shape
    # Stand-in LM / GNN sub-layers (plain-JAX glue; see TODO at top).
    lm_res = jnp.dot(x, params["lm_w"]) + params["lm_b"]      # [B, S, D]
    gnn_res = jnp.dot(x, params["gnn_w"]) + params["gnn_b"]   # [B, S, D]
    # No [B*S, 2D] concat buffer, no padding copy, no wrapper bf16 cast:
    # the concat + first Linear is fused into the kernel (split-W1 trick).
    out = greaselm_mlp(
        lm_res.reshape(B * S, D), gnn_res.reshape(B * S, D),
        params["w1"], params["b1"], params["g1"], params["be1"],
        params["w2"], params["b2"], params["g2"], params["be2"],
        row_tile=row_tile,
    )
    return out.reshape(B, S, -1)


def make_params(key, d_model, in_dim, hidden_dim, out_dim):
    ks = jax.random.split(key, 8)
    scale = lambda fan_in: 1.0 / jnp.sqrt(jnp.float32(fan_in))
    return {
        # stand-in LM / GNN linear projections
        "lm_w": jax.random.normal(ks[0], (d_model, d_model), jnp.float32) * scale(d_model),
        "lm_b": jax.random.normal(ks[1], (d_model,), jnp.float32) * 0.01,
        "gnn_w": jax.random.normal(ks[2], (d_model, d_model), jnp.float32) * scale(d_model),
        "gnn_b": jax.random.normal(ks[3], (d_model,), jnp.float32) * 0.01,
        # MLP: Linear(in, hidden) -> GELU -> LN(hidden) -> Linear(hidden, out) -> LN(out)
        "w1": jax.random.normal(ks[4], (in_dim, hidden_dim), jnp.float32) * scale(in_dim),
        "b1": jax.random.normal(ks[5], (1, hidden_dim), jnp.float32) * 0.01,
        "g1": jnp.ones((1, hidden_dim), jnp.float32),
        "be1": jnp.zeros((1, hidden_dim), jnp.float32),
        "w2": jax.random.normal(ks[6], (hidden_dim, out_dim), jnp.float32) * scale(hidden_dim),
        "b2": jax.random.normal(ks[7], (1, out_dim), jnp.float32) * 0.01,
        "g2": jnp.ones((1, out_dim), jnp.float32),
        "be2": jnp.zeros((1, out_dim), jnp.float32),
    }


def _reference_forward(x, p, matmul_dtype=jnp.float32):
    """Pure-JAX reference. matmul_dtype=bf16 mirrors the kernel's MXU casts."""
    c = lambda a: a.astype(matmul_dtype)
    lm_res = jnp.dot(x, p["lm_w"]) + p["lm_b"]
    gnn_res = jnp.dot(x, p["gnn_w"]) + p["gnn_b"]
    cat = jnp.concatenate([lm_res, gnn_res], axis=-1)
    h = jnp.dot(c(cat), c(p["w1"]), preferred_element_type=jnp.float32) + p["b1"]
    h = _gelu_exact(h)
    h = _layernorm(h, p["g1"], p["be1"])
    y = jnp.dot(c(h), c(p["w2"]), preferred_element_type=jnp.float32) + p["b2"]
    y = _layernorm(y, p["g2"], p["be2"])
    return y


if __name__ == "__main__":
    # Small shapes: batch=2, seq=8, d_model=32 -> in_dim=64, hidden=32, out=32
    B, S, D = 2, 8, 32
    in_dim, hidden_dim, out_dim = 2 * D, 32, 32

    key = jax.random.PRNGKey(0)
    kx, kp = jax.random.split(key)
    x = jax.random.normal(kx, (B, S, D), jnp.float32)
    params = make_params(kp, D, in_dim, hidden_dim, out_dim)

    out = jax.jit(greaselm_layer_forward)(x, params)
    out = jax.block_until_ready(out)

    ref_matched = _reference_forward(x, params, matmul_dtype=jnp.bfloat16)
    ref_f32 = _reference_forward(x, params, matmul_dtype=jnp.float32)

    assert out.shape == (B, S, out_dim), out.shape
    # Tight check against a reference that applies the same bf16 MXU casts.
    assert jnp.allclose(out, ref_matched, atol=2e-3, rtol=2e-3), \
        float(jnp.max(jnp.abs(out - ref_matched)))
    # Loose sanity check against the full-f32 reference (bf16 matmul error).
    assert jnp.allclose(out, ref_f32, atol=6e-2, rtol=6e-2), \
        float(jnp.max(jnp.abs(out - ref_f32)))

    print("KERNEL_OK")
</pallas_src>

<mosaic_0001>
module attributes {stable_mosaic.version = 11 : i64} {
  func.func @greaselm_mlp_kernel(%arg0: i32, %arg1: memref<16x32xf32, #tpu.memory_space<vmem>>, %arg2: memref<16x32xf32, #tpu.memory_space<vmem>>, %arg3: memref<32x32xbf16, #tpu.memory_space<vmem>>, %arg4: memref<32x32xbf16, #tpu.memory_space<vmem>>, %arg5: memref<1x32xf32, #tpu.memory_space<vmem>>, %arg6: memref<1x32xf32, #tpu.memory_space<vmem>>, %arg7: memref<1x32xf32, #tpu.memory_space<vmem>>, %arg8: memref<32x32xbf16, #tpu.memory_space<vmem>>, %arg9: memref<1x32xf32, #tpu.memory_space<vmem>>, %arg10: memref<1x32xf32, #tpu.memory_space<vmem>>, %arg11: memref<1x32xf32, #tpu.memory_space<vmem>>, %arg12: memref<16x32xf32, #tpu.memory_space<vmem>>) attributes {dimension_semantics = [#tpu.dimension_semantics<parallel>], iteration_bounds = array<i64: 1>, scalar_prefetch = 0 : i64, scratch_operands = 0 : i64, tpu.core_type = #tpu.core_type<tc>, window_params = [{transform_indices = @transform_0, window_bounds = array<i64: 16, 32>}, {transform_indices = @transform_1, window_bounds = array<i64: 16, 32>}, {pipeline_mode = #tpu.pipeline_mode<synchronous>, transform_indices = @transform_2, window_bounds = array<i64: 32, 32>}, {pipeline_mode = #tpu.pipeline_mode<synchronous>, transform_indices = @transform_3, window_bounds = array<i64: 32, 32>}, {pipeline_mode = #tpu.pipeline_mode<synchronous>, transform_indices = @transform_4, window_bounds = array<i64: 1, 32>}, {pipeline_mode = #tpu.pipeline_mode<synchronous>, transform_indices = @transform_5, window_bounds = array<i64: 1, 32>}, {pipeline_mode = #tpu.pipeline_mode<synchronous>, transform_indices = @transform_6, window_bounds = array<i64: 1, 32>}, {pipeline_mode = #tpu.pipeline_mode<synchronous>, transform_indices = @transform_7, window_bounds = array<i64: 32, 32>}, {pipeline_mode = #tpu.pipeline_mode<synchronous>, transform_indices = @transform_8, window_bounds = array<i64: 1, 32>}, {pipeline_mode = #tpu.pipeline_mode<synchronous>, transform_indices = @transform_9, window_bounds = array<i64: 1, 32>}, {pipeline_mode = #tpu.pipeline_mode<synchronous>, transform_indices = @transform_10, window_bounds = array<i64: 1, 32>}, {transform_indices = @transform_11, window_bounds = array<i64: 16, 32>}]} {
    %c0 = arith.constant 0 : index
    %c0_0 = arith.constant 0 : index
    %0 = vector.load %arg1[%c0, %c0_0] : memref<16x32xf32, #tpu.memory_space<vmem>>, vector<16x32xf32>
    %1 = arith.truncf %0 : vector<16x32xf32> to vector<16x32xbf16>
    %c0_1 = arith.constant 0 : index
    %c0_2 = arith.constant 0 : index
    %2 = vector.load %arg2[%c0_1, %c0_2] : memref<16x32xf32, #tpu.memory_space<vmem>>, vector<16x32xf32>
    %3 = arith.truncf %2 : vector<16x32xf32> to vector<16x32xbf16>
    %c0_3 = arith.constant 0 : index
    %c0_4 = arith.constant 0 : index
    %4 = vector.load %arg3[%c0_3, %c0_4] : memref<32x32xbf16, #tpu.memory_space<vmem>>, vector<32x32xbf16>
    %cst = arith.constant dense<0.000000e+00> : vector<16x32xf32>
    %5 = tpu.matmul %1, %4, %cst {dimension_numbers = #tpu.dot_dimension_numbers<[1], [0], [0], [1], [0, 0, 1, 1], [], []>} : vector<16x32xbf16>, vector<32x32xbf16>, vector<16x32xf32> -> vector<16x32xf32>
    %c0_5 = arith.constant 0 : index
    %c0_6 = arith.constant 0 : index
    %6 = vector.load %arg4[%c0_5, %c0_6] : memref<32x32xbf16, #tpu.memory_space<vmem>>, vector<32x32xbf16>
    %cst_7 = arith.constant dense<0.000000e+00> : vector<16x32xf32>
    %7 = tpu.matmul %3, %6, %cst_7 {dimension_numbers = #tpu.dot_dimension_numbers<[1], [0], [0], [1], [0, 0, 1, 1], [], []>} : vector<16x32xbf16>, vector<32x32xbf16>, vector<16x32xf32> -> vector<16x32xf32>
    %8 = arith.addf %5, %7 : vector<16x32xf32>
    %c0_8 = arith.constant 0 : index
    %c0_9 = arith.constant 0 : index
    %9 = vector.load %arg5[%c0_8, %c0_9] : memref<1x32xf32, #tpu.memory_space<vmem>>, vector<1x32xf32>
    %10 = vector.broadcast %9 : vector<1x32xf32> to vector<16x32xf32>
    %11 = arith.addf %8, %10 : vector<16x32xf32>
    %cst_10 = arith.constant 5.000000e-01 : f32
    %12 = vector.broadcast %cst_10 : f32 to vector<16x32xf32>
    %13 = arith.mulf %12, %11 : vector<16x32xf32>
    %cst_11 = arith.constant 2.000000e+00 : f32
    %14 = math.sqrt %cst_11 : f32
    %cst_12 = arith.constant 1.000000e+00 : f32
    %15 = arith.divf %cst_12, %14 : f32
    %16 = vector.broadcast %15 : f32 to vector<16x32xf32>
    %17 = arith.mulf %11, %16 : vector<16x32xf32>
    %18 = math.erf %17 : vector<16x32xf32>
    %cst_13 = arith.constant 1.000000e+00 : f32
    %19 = vector.broadcast %cst_13 : f32 to vector<16x32xf32>
    %20 = arith.addf %19, %18 : vector<16x32xf32>
    %21 = arith.mulf %13, %20 : vector<16x32xf32>
    %c0_14 = arith.constant 0 : index
    %c0_15 = arith.constant 0 : index
    %22 = vector.load %arg6[%c0_14, %c0_15] : memref<1x32xf32, #tpu.memory_space<vmem>>, vector<1x32xf32>
    %c0_16 = arith.constant 0 : index
    %c0_17 = arith.constant 0 : index
    %23 = vector.load %arg7[%c0_16, %c0_17] : memref<1x32xf32, #tpu.memory_space<vmem>>, vector<1x32xf32>
    %cst_18 = arith.constant dense<0.000000e+00> : vector<16xf32>
    %24 = vector.multi_reduction <add>, %21, %cst_18 [1] : vector<16x32xf32> to vector<16xf32>
    %25 = vector.shape_cast %24 : vector<16xf32> to vector<16x1xf32>
    %cst_19 = arith.constant 3.200000e+01 : f32
    %26 = vector.broadcast %cst_19 : f32 to vector<16x1xf32>
    %27 = arith.divf %25, %26 : vector<16x1xf32>
    %28 = vector.broadcast %27 : vector<16x1xf32> to vector<16x32xf32>
    %29 = arith.subf %21, %28 : vector<16x32xf32>
    %30 = arith.mulf %29, %29 : vector<16x32xf32>
    %cst_20 = arith.constant dense<0.000000e+00> : vector<16xf32>
    %31 = vector.multi_reduction <add>, %30, %cst_20 [1] : vector<16x32xf32> to vector<16xf32>
    %32 = vector.shape_cast %31 : vector<16xf32> to vector<16x1xf32>
    %cst_21 = arith.constant 3.200000e+01 : f32
    %33 = vector.broadcast %cst_21 : f32 to vector<16x1xf32>
    %34 = arith.divf %32, %33 : vector<16x1xf32>
    %35 = vector.broadcast %27 : vector<16x1xf32> to vector<16x32xf32>
    %36 = arith.subf %21, %35 : vector<16x32xf32>
    %cst_22 = arith.constant 9.99999974E-6 : f32
    %37 = vector.broadcast %cst_22 : f32 to vector<16x1xf32>
    %38 = arith.addf %34, %37 : vector<16x1xf32>
    %39 = math.rsqrt %38 : vector<16x1xf32>
    %40 = vector.broadcast %39 : vector<16x1xf32> to vector<16x32xf32>
    %41 = arith.mulf %36, %40 : vector<16x32xf32>
    %42 = vector.broadcast %22 : vector<1x32xf32> to vector<16x32xf32>
    %43 = arith.mulf %41, %42 : vector<16x32xf32>
    %44 = vector.broadcast %23 : vector<1x32xf32> to vector<16x32xf32>
    %45 = arith.addf %43, %44 : vector<16x32xf32>
    %46 = arith.truncf %45 : vector<16x32xf32> to vector<16x32xbf16>
    %c0_23 = arith.constant 0 : index
    %c0_24 = arith.constant 0 : index
    %47 = vector.load %arg8[%c0_23, %c0_24] : memref<32x32xbf16, #tpu.memory_space<vmem>>, vector<32x32xbf16>
    %cst_25 = arith.constant dense<0.000000e+00> : vector<16x32xf32>
    %48 = tpu.matmul %46, %47, %cst_25 {dimension_numbers = #tpu.dot_dimension_numbers<[1], [0], [0], [1], [0, 0, 1, 1], [], []>} : vector<16x32xbf16>, vector<32x32xbf16>, vector<16x32xf32> -> vector<16x32xf32>
    %c0_26 = arith.constant 0 : index
    %c0_27 = arith.constant 0 : index
    %49 = vector.load %arg9[%c0_26, %c0_27] : memref<1x32xf32, #tpu.memory_space<vmem>>, vector<1x32xf32>
    %50 = vector.broadcast %49 : vector<1x32xf32> to vector<16x32xf32>
    %51 = arith.addf %48, %50 : vector<16x32xf32>
    %c0_28 = arith.constant 0 : index
    %c0_29 = arith.constant 0 : index
    %52 = vector.load %arg10[%c0_28, %c0_29] : memref<1x32xf32, #tpu.memory_space<vmem>>, vector<1x32xf32>
    %c0_30 = arith.constant 0 : index
    %c0_31 = arith.constant 0 : index
    %53 = vector.load %arg11[%c0_30, %c0_31] : memref<1x32xf32, #tpu.memory_space<vmem>>, vector<1x32xf32>
    %cst_32 = arith.constant dense<0.000000e+00> : vector<16xf32>
    %54 = vector.multi_reduction <add>, %51, %cst_32 [1] : vector<16x32xf32> to vector<16xf32>
    %55 = vector.shape_cast %54 : vector<16xf32> to vector<16x1xf32>
    %cst_33 = arith.constant 3.200000e+01 : f32
    %56 = vector.broadcast %cst_33 : f32 to vector<16x1xf32>
    %57 = arith.divf %55, %56 : vector<16x1xf32>
    %58 = vector.broadcast %57 : vector<16x1xf32> to vector<16x32xf32>
    %59 = arith.subf %51, %58 : vector<16x32xf32>
    %60 = arith.mulf %59, %59 : vector<16x32xf32>
    %cst_34 = arith.constant dense<0.000000e+00> : vector<16xf32>
    %61 = vector.multi_reduction <add>, %60, %cst_34 [1] : vector<16x32xf32> to vector<16xf32>
    %62 = vector.shape_cast %61 : vector<16xf32> to vector<16x1xf32>
    %cst_35 = arith.constant 3.200000e+01 : f32
    %63 = vector.broadcast %cst_35 : f32 to vector<16x1xf32>
    %64 = arith.divf %62, %63 : vector<16x1xf32>
    %65 = vector.broadcast %57 : vector<16x1xf32> to vector<16x32xf32>
    %66 = arith.subf %51, %65 : vector<16x32xf32>
    %cst_36 = arith.constant 9.99999974E-6 : f32
    %67 = vector.broadcast %cst_36 : f32 to vector<16x1xf32>
    %68 = arith.addf %64, %67 : vector<16x1xf32>
    %69 = math.rsqrt %68 : vector<16x1xf32>
    %70 = vector.broadcast %69 : vector<16x1xf32> to vector<16x32xf32>
    %71 = arith.mulf %66, %70 : vector<16x32xf32>
    %72 = vector.broadcast %52 : vector<1x32xf32> to vector<16x32xf32>
    %73 = arith.mulf %71, %72 : vector<16x32xf32>
    %74 = vector.broadcast %53 : vector<1x32xf32> to vector<16x32xf32>
    %75 = arith.addf %73, %74 : vector<16x32xf32>
    %c0_37 = arith.constant 0 : index
    %c0_38 = arith.constant 0 : index
    %76 = vector.load %arg12[%c0_37, %c0_38] : memref<16x32xf32, #tpu.memory_space<vmem>>, vector<16x32xf32>
    tpu.vector_store %arg12[%c0_37, %c0_38], %75 {strides = array<i32>} : memref<16x32xf32, #tpu.memory_space<vmem>>, vector<16x32xf32>,
    return
  }
  func.func @transform_0(%arg0: i32) -> (i32, i32) {
    %c0_i32 = arith.constant 0 : i32
    %c0_i32_0 = arith.constant 0 : i32
    return %arg0, %c0_i32 : i32, i32
  }
  func.func @transform_1(%arg0: i32) -> (i32, i32) {
    %c0_i32 = arith.constant 0 : i32
    %c0_i32_0 = arith.constant 0 : i32
    return %arg0, %c0_i32 : i32, i32
  }
  func.func @transform_2(%arg0: i32) -> (i32, i32) {
    %c0_i32 = arith.constant 0 : i32
    %c0_i32_0 = arith.constant 0 : i32
    %c0_i32_1 = arith.constant 0 : i32
    return %c0_i32, %c0_i32_0 : i32, i32
  }
  func.func @transform_3(%arg0: i32) -> (i32, i32) {
    %c0_i32 = arith.constant 0 : i32
    %c0_i32_0 = arith.constant 0 : i32
    %c0_i32_1 = arith.constant 0 : i32
    return %c0_i32, %c0_i32_0 : i32, i32
  }
  func.func @transform_4(%arg0: i32) -> (i32, i32) {
    %c0_i32 = arith.constant 0 : i32
    %c0_i32_0 = arith.constant 0 : i32
    %c0_i32_1 = arith.constant 0 : i32
    return %c0_i32, %c0_i32_0 : i32, i32
  }
  func.func @transform_5(%arg0: i32) -> (i32, i32) {
    %c0_i32 = arith.constant 0 : i32
    %c0_i32_0 = arith.constant 0 : i32
    %c0_i32_1 = arith.constant 0 : i32
    return %c0_i32, %c0_i32_0 : i32, i32
  }
  func.func @transform_6(%arg0: i32) -> (i32, i32) {
    %c0_i32 = arith.constant 0 : i32
    %c0_i32_0 = arith.constant 0 : i32
    %c0_i32_1 = arith.constant 0 : i32
    return %c0_i32, %c0_i32_0 : i32, i32
  }
  func.func @transform_7(%arg0: i32) -> (i32, i32) {
    %c0_i32 = arith.constant 0 : i32
    %c0_i32_0 = arith.constant 0 : i32
    %c0_i32_1 = arith.constant 0 : i32
    return %c0_i32, %c0_i32_0 : i32, i32
  }
  func.func @transform_8(%arg0: i32) -> (i32, i32) {
    %c0_i32 = arith.constant 0 : i32
    %c0_i32_0 = arith.constant 0 : i32
    %c0_i32_1 = arith.constant 0 : i32
    return %c0_i32, %c0_i32_0 : i32, i32
  }
  func.func @transform_9(%arg0: i32) -> (i32, i32) {
    %c0_i32 = arith.constant 0 : i32
    %c0_i32_0 = arith.constant 0 : i32
    %c0_i32_1 = arith.constant 0 : i32
    return %c0_i32, %c0_i32_0 : i32, i32
  }
  func.func @transform_10(%arg0: i32) -> (i32, i32) {
    %c0_i32 = arith.constant 0 : i32
    %c0_i32_0 = arith.constant 0 : i32
    %c0_i32_1 = arith.constant 0 : i32
    return %c0_i32, %c0_i32_0 : i32, i32
  }
  func.func @transform_11(%arg0: i32) -> (i32, i32) {
    %c0_i32 = arith.constant 0 : i32
    %c0_i32_0 = arith.constant 0 : i32
    return %arg0, %c0_i32 : i32, i32
  }
}

</mosaic_0001>

<llo_original>
// kernel: greaselm_layer_forward.1
$region0: #{greaselm_layer_forward.1}
  #allocation0 [shape = 'u32[]', space=smem, size = 0x4, offset = 0x4, fixed_abs, tag = 'smem constant byte address 0x4 - core index']
  #allocation1 [shape = 'u32[144,128]{1,0:T(1,128)}', space=vmem, size = 0x12000, scoped, tag = 'internal scratch']
  %s0 = inlined_call_operand.vmem [shape: f32[16,32], index: 0, kind: input, shape index: {}]
  %s1 = inlined_call_operand.vmem [shape: f32[16,32], index: 1, kind: input, shape index: {}]
  %s2 = inlined_call_operand.vmem [shape: bf16[32,32], index: 2, kind: input, shape index: {}]
  %s3 = inlined_call_operand.vmem [shape: bf16[32,32], index: 3, kind: input, shape index: {}]
  %s4 = inlined_call_operand.vmem [shape: f32[1,32], index: 4, kind: input, shape index: {}]
  %s5 = inlined_call_operand.vmem [shape: f32[1,32], index: 5, kind: input, shape index: {}]
  %s6 = inlined_call_operand.vmem [shape: f32[1,32], index: 6, kind: input, shape index: {}]
  %s7 = inlined_call_operand.vmem [shape: bf16[32,32], index: 7, kind: input, shape index: {}]
  %s8 = inlined_call_operand.vmem [shape: f32[1,32], index: 8, kind: input, shape index: {}]
  %s9 = inlined_call_operand.vmem [shape: f32[1,32], index: 9, kind: input, shape index: {}]
  %s10 = inlined_call_operand.vmem [shape: f32[1,32], index: 10, kind: input, shape index: {}]
  %s11 = inlined_call_operand.hbm [shape: f32[16,32], index: 11, kind: output, shape index: {}]
  %s12 = sld [smem:[#allocation0]]
  $region54: #{greaselm_layer_forward.1} parent=0
    _
  %s14 = ssub.s32 1, %s12
  %s15 = scalar_select 0, %s14, %s12
  $region1: #{greaselm_layer_forward.1} parent=0
    #allocation2 [shape = 'u8[8192]{0}', space=vmem, size = 0x2000, scoped, tag = 'output window, operand 0, single buffered']
    #allocation3 [shape = 's32[1]{0}', space=sflag, size = 0x4, scoped, tag = 'scoped memory for greaselm_layer_forward.1']
    %16 = vsyncpa [#allocation3], 0
    // Predicated region
    $region2: #{greaselm_layer_forward.1} parent=1 // pred_check
      _
    $region3: #{greaselm_layer_forward.1} parent=1 // pred_check_branch
      %18 = sbr.rel (0) target = $region5
    $region4: #{greaselm_layer_forward.1} parent=1 // pred_region
      _
    $region5: #{greaselm_layer_forward.1} parent=1 // pred_fallthru
      _
    // Predicated region
    $region6: #{greaselm_layer_forward.1} parent=1 // pred_check
      _
    $region7: #{greaselm_layer_forward.1} parent=1 // pred_check_branch
      %20 = sbr.rel (0) target = $region9
    $region8: #{greaselm_layer_forward.1} parent=1 // pred_region
      _
    $region9: #{greaselm_layer_forward.1} parent=1 // pred_fallthru
      _
    // Predicated region
    $region10: #{greaselm_layer_forward.1} parent=1 // pred_check
      _
    $region11: #{greaselm_layer_forward.1} parent=1 // pred_check_branch
      %22 = sbr.rel (0) target = $region13
    $region12: #{greaselm_layer_forward.1} parent=1 // pred_region
      _
    $region13: #{greaselm_layer_forward.1} parent=1 // pred_fallthru
      _
    // Predicated region
    $region14: #{greaselm_layer_forward.1} parent=1 // pred_check
      _
    $region15: #{greaselm_layer_forward.1} parent=1 // pred_check_branch
      %24 = sbr.rel (0) target = $region17
    $region16: #{greaselm_layer_forward.1} parent=1 // pred_region
      _
    $region17: #{greaselm_layer_forward.1} parent=1 // pred_fallthru
      _
    // Predicated region
    $region18: #{greaselm_layer_forward.1} parent=1 // pred_check
      _
    $region19: #{greaselm_layer_forward.1} parent=1 // pred_check_branch
      %26 = sbr.rel (0) target = $region21
    $region20: #{greaselm_layer_forward.1} parent=1 // pred_region
      _
    $region21: #{greaselm_layer_forward.1} parent=1 // pred_fallthru
      _
    // Predicated region
    $region22: #{greaselm_layer_forward.1} parent=1 // pred_check
      _
    $region23: #{greaselm_layer_forward.1} parent=1 // pred_check_branch
      %28 = sbr.rel (0) target = $region25
    $region24: #{greaselm_layer_forward.1} parent=1 // pred_region
      _
    $region25: #{greaselm_layer_forward.1} parent=1 // pred_fallthru
      _
    // Predicated region
    $region26: #{greaselm_layer_forward.1} parent=1 // pred_check
      _
    $region27: #{greaselm_layer_forward.1} parent=1 // pred_check_branch
      %30 = sbr.rel (0) target = $region29
    $region28: #{greaselm_layer_forward.1} parent=1 // pred_region
      _
    $region29: #{greaselm_layer_forward.1} parent=1 // pred_fallthru
      _
    // Predicated region
    $region30: #{greaselm_layer_forward.1} parent=1 // pred_check
      _
    $region31: #{greaselm_layer_forward.1} parent=1 // pred_check_branch
      %32 = sbr.rel (0) target = $region33
    $region32: #{greaselm_layer_forward.1} parent=1 // pred_region
      _
    $region33: #{greaselm_layer_forward.1} parent=1 // pred_fallthru
      _
    // Predicated region
    $region34: #{greaselm_layer_forward.1} parent=1 // pred_check
      _
    $region35: #{greaselm_layer_forward.1} parent=1 // pred_check_branch
      %34 = sbr.rel (0) target = $region37
    $region36: #{greaselm_layer_forward.1} parent=1 // pred_region
      _
    $region37: #{greaselm_layer_forward.1} parent=1 // pred_fallthru
      _
    // Predicated region
    $region38: #{greaselm_layer_forward.1} parent=1 // pred_check
      _
    $region39: #{greaselm_layer_forward.1} parent=1 // pred_check_branch
      %36 = sbr.rel (0) target = $region41
    $region40: #{greaselm_layer_forward.1} parent=1 // pred_region
      _
    $region41: #{greaselm_layer_forward.1} parent=1 // pred_fallthru
      _
    // Predicated region
    $region42: #{greaselm_layer_forward.1} parent=1 // pred_check
      _
    $region43: #{greaselm_layer_forward.1} parent=1 // pred_check_branch
      %38 = sbr.rel (0) target = $region45
    $region44: #{greaselm_layer_forward.1} parent=1 // pred_region
      _
    $region45: #{greaselm_layer_forward.1} parent=1 // pred_fallthru
      _
    %v40 = vld [vmem:[%s0] sm:$0xff]
    %v41 = vld [vmem:[%s0 + $0x8] sm:$0xff]
    %v42 = vpack.c.bf16 %v41, %v40
    %v43 = vld [vmem:[%s1] sm:$0xff]
    %v44 = vld [vmem:[%s1 + $0x8] sm:$0xff]
    %v45 = vpack.c.bf16 %v44, %v43
    %v46 = vld [vmem:[%s2] sm:$0xf]
    %v47 = vld [vmem:[%s2 + $0x4] sm:$0xf]
    %v48 = vld [vmem:[%s2 + $0x8] sm:$0xf]
    %v49 = vld [vmem:[%s2 + $0xc] sm:$0xf]
    %v50 = vld [vmem:[%s3] sm:$0xf]
    %v51 = vld [vmem:[%s3 + $0x4] sm:$0xf]
    %v52 = vld [vmem:[%s3 + $0x8] sm:$0xf]
    %v53 = vld [vmem:[%s3 + $0xc] sm:$0xf]
    %v58 = vunpack.c.l.b16 %v50
    %v59 = vunpack.c.l.b16 %v51
    %v60 = vunpack.c.l.b16 %v52
    %v61 = vunpack.c.l.b16 %v53
    %v62 = vpack.c.b16 %v59, %v58
    %v63 = vpack.c.b16 %v61, %v60
    %vm66 = vcmask 261120
    %v68 = vsel %vm66, %v45, 0
    %70 = vmatprep.subr.bf16.mxu0 0
    %71 = vmatpush1.bf16.msra.mxu0 0
    %72 = vmatprep.subr.bf16.mxu0 0
    %73 = vmatpush1.bf16.msra.mxu0 0
    %74 = vmatprep.subr.bf16.mxu0 0
    %75 = vmatpush1.bf16.msra.mxu0 0
    %76 = vmatprep.subr.bf16.mxu0 0
    %77 = vmatpush1.bf16.msra.mxu0 0
    %78 = vmatprep.subr.bf16.mxu0 0
    %79 = vmatpush1.bf16.msra.mxu0 0
    %80 = vmatprep.subr.bf16.mxu0 0
    %81 = vmatpush1.bf16.msra.mxu0 0
    %82 = vmatprep.subr.bf16.mxu0 0
    %83 = vmatpush1.bf16.msra.mxu0 %v63
    %84 = vmatprep.subr.bf16.mxu0 0
    %85 = vmatpush1.bf16.msra.mxu0 %v62
    %86 = vmatprep.subr.bf16.mxu0 0
    %87 = vmatpush2.bf16.msra.mxu0 0
    %88 = vmatprep.subr.bf16.mxu0 0
    %89 = vmatpush2.bf16.msra.mxu0 0
    %90 = vmatprep.subr.bf16.mxu0 0
    %91 = vmatpush2.bf16.msra.mxu0 0
    %92 = vmatprep.subr.bf16.mxu0 0
    %93 = vmatpush2.bf16.msra.mxu0 0
    %94 = vmatprep.subr.bf16.mxu0 0
    %95 = vmatpush2.bf16.msra.mxu0 0
    %96 = vmatprep.subr.bf16.mxu0 0
    %97 = vmatpush2.bf16.msra.mxu0 0
    %98 = vmatprep.subr.bf16.mxu0 0
    %99 = vmatpush2.bf16.msra.mxu0 0
    %100 = vmatprep.subr.bf16.mxu0 0
    %101 = vmatpush2.bf16.msra.mxu0 0
    %102 = vmatprep.mubr.bf16.mxu0 0
    %103 = vmatmul.mubr.bf16.gmra.mxu0 %v68
    %v104 = vpop.f32.mrf.mxu0
    %v105 = vadd.f32 0.0, %v104
    %v106 = vpop.f32.mrf.mxu0
    %v107 = vpop.f32.mrf.mxu0
    %v108 = vadd.f32 0.0, %v107
    %v109 = vpop.f32.mrf.mxu0
    %110 = vdwg.mxu0
    %v115 = vunpack.c.l.b16 %v46
    %v116 = vunpack.c.l.b16 %v47
    %v117 = vunpack.c.l.b16 %v48
    %v118 = vunpack.c.l.b16 %v49
    %v119 = vpack.c.b16 %v116, %v115
    %v120 = vpack.c.b16 %v118, %v117
    %v124 = vsel %vm66, %v42, 0
    %126 = vmatprep.subr.bf16.mxu0 0
    %127 = vmatpush1.bf16.msra.mxu0 0
    %128 = vmatprep.subr.bf16.mxu0 0
    %129 = vmatpush1.bf16.msra.mxu0 0
    %130 = vmatprep.subr.bf16.mxu0 0
    %131 = vmatpush1.bf16.msra.mxu0 0
    %132 = vmatprep.subr.bf16.mxu0 0
    %133 = vmatpush1.bf16.msra.mxu0 0
    %134 = vmatprep.subr.bf16.mxu0 0
    %135 = vmatpush1.bf16.msra.mxu0 0
    %136 = vmatprep.subr.bf16.mxu0 0
    %137 = vmatpush1.bf16.msra.mxu0 0
    %138 = vmatprep.subr.bf16.mxu0 0
    %139 = vmatpush1.bf16.msra.mxu0 %v120
    %140 = vmatprep.subr.bf16.mxu0 0
    %141 = vmatpush1.bf16.msra.mxu0 %v119
    %142 = vmatprep.subr.bf16.mxu0 0
    %143 = vmatpush2.bf16.msra.mxu0 0
    %144 = vmatprep.subr.bf16.mxu0 0
    %145 = vmatpush2.bf16.msra.mxu0 0
    %146 = vmatprep.subr.bf16.mxu0 0
    %147 = vmatpush2.bf16.msra.mxu0 0
    %148 = vmatprep.subr.bf16.mxu0 0
    %149 = vmatpush2.bf16.msra.mxu0 0
    %150 = vmatprep.subr.bf16.mxu0 0
    %151 = vmatpush2.bf16.msra.mxu0 0
    %152 = vmatprep.subr.bf16.mxu0 0
    %153 = vmatpush2.bf16.msra.mxu0 0
    %154 = vmatprep.subr.bf16.mxu0 0
    %155 = vmatpush2.bf16.msra.mxu0 0
    %156 = vmatprep.subr.bf16.mxu0 0
    %157 = vmatpush2.bf16.msra.mxu0 0
    %158 = vmatprep.mubr.bf16.mxu0 0
    %159 = vmatmul.mubr.bf16.gmra.mxu0 %v124
    %v160 = vpop.f32.mrf.mxu0
    %v161 = vadd.f32 %v105, %v160
    %v162 = vpop.f32.mrf.mxu0
    %v163 = vpop.f32.mrf.mxu0
    %v164 = vadd.f32 %v108, %v163
    %v165 = vpop.f32.mrf.mxu0
    %166 = vdwg.mxu0
    %v167 = vld [vmem:[%s4] sm:$0x1]
    %v169 = vlaneseq
    %v170 = vshrl.u32 %v169, 7
    %v171 = vsub.s32 0, %v170
    %v172 = vrot.slane %v167, %v171
    %v174 = vadd.f32 %v161, %v172
    %v175 = vadd.f32 %v164, %v172
    %v176 = vmul.f32 %v174, 0.5
    %v177 = vmul.f32 %v175, 0.5
    %v178 = vmul.f32 %v174, 0.70710677
    %v179 = vmul.f32 %v175, 0.70710677
    %v180 = verf.f32.pop %v178
    %v181 = verf.f32.pop %v179
    %v182 = vadd.f32 %v180, 1.0
    %v183 = vadd.f32 %v181, 1.0
    %v184 = vmul.f32 %v176, %v182
    %v185 = vmul.f32 %v177, %v183
    %v186 = vld [vmem:[%s5] sm:$0x1]
    %v187 = vld [vmem:[%s6] sm:$0x1]
    %v188 = vsel %vm66, %v184, 0.0
    %189 = vadd.xlane.f32.xlu0 %v188
    %v190 = vpop.xlane.xlu0 %189
    %v191 = vsel %vm66, %v185, 0.0
    %192 = vadd.xlane.f32.xlu0 %v191
    %v193 = vpop.xlane.xlu0 %192
    %v194 = vrcp.pop 32.0
    %v195 = vmul.f32 %v190, %v194
    %v196 = vmul.f32 %v193, %v194
    %v197 = vsub.f32 %v184, %v195
    %v198 = vsub.f32 %v185, %v196
    %v199 = vmul.f32 %v197, %v197
    %v200 = vmul.f32 %v198, %v198
    %v201 = vsel %vm66, %v199, 0.0
    %202 = vadd.xlane.f32.xlu0 %v201
    %v203 = vpop.xlane.xlu0 %202
    %v204 = vsel %vm66, %v200, 0.0
    %205 = vadd.xlane.f32.xlu0 %v204
    %v206 = vpop.xlane.xlu0 %205
    %v207 = vmul.f32 %v203, %v194
    %v208 = vmul.f32 %v206, %v194
    %v209 = vadd.f32 %v207, 1e-05
    %v210 = vadd.f32 %v208, 1e-05
    %v211 = vrsqrt.pop %v209
    %v212 = vrsqrt.pop %v210
    %v213 = vmul.f32 %v197, %v211
    %v214 = vmul.f32 %v198, %v212
    %v216 = vlaneseq
    %v217 = vshrl.u32 %v216, 7
    %v218 = vsub.s32 0, %v217
    %v219 = vrot.slane %v186, %v218
    %v221 = vmul.f32 %v213, %v219
    %v222 = vmul.f32 %v214, %v219
    %v224 = vlaneseq
    %v225 = vshrl.u32 %v224, 7
    %v226 = vsub.s32 0, %v225
    %v227 = vrot.slane %v187, %v226
    %v229 = vadd.f32 %v221, %v227
    %v230 = vadd.f32 %v222, %v227
    %v231 = vpack.c.bf16 %v230, %v229
    %v232 = vld [vmem:[%s7] sm:$0xf]
    %v233 = vld [vmem:[%s7 + $0x4] sm:$0xf]
    %v234 = vld [vmem:[%s7 + $0x8] sm:$0xf]
    %v235 = vld [vmem:[%s7 + $0xc] sm:$0xf]
    %v236 = vld [vmem:[%s8] sm:$0x1]
    %v238 = vlaneseq
    %v239 = vshrl.u32 %v238, 7
    %v240 = vsub.s32 0, %v239
    %v241 = vrot.slane %v236, %v240
    %v247 = vunpack.c.l.b16 %v232
    %v248 = vunpack.c.l.b16 %v233
    %v249 = vunpack.c.l.b16 %v234
    %v250 = vunpack.c.l.b16 %v235
    %v251 = vpack.c.b16 %v248, %v247
    %v252 = vpack.c.b16 %v250, %v249
    %v256 = vsel %vm66, %v231, 0
    %258 = vmatprep.subr.bf16.mxu0 0
    %259 = vmatpush1.bf16.msra.mxu0 0
    %260 = vmatprep.subr.bf16.mxu0 0
    %261 = vmatpush1.bf16.msra.mxu0 0
    %262 = vmatprep.subr.bf16.mxu0 0
    %263 = vmatpush1.bf16.msra.mxu0 0
    %264 = vmatprep.subr.bf16.mxu0 0
    %265 = vmatpush1.bf16.msra.mxu0 0
    %266 = vmatprep.subr.bf16.mxu0 0
    %267 = vmatpush1.bf16.msra.mxu0 0
    %268 = vmatprep.subr.bf16.mxu0 0
    %269 = vmatpush1.bf16.msra.mxu0 0
    %270 = vmatprep.subr.bf16.mxu0 0
    %271 = vmatpush1.bf16.msra.mxu0 %v252
    %272 = vmatprep.subr.bf16.mxu0 0
    %273 = vmatpush1.bf16.msra.mxu0 %v251
    %274 = vmatprep.subr.bf16.mxu0 0
    %275 = vmatpush2.bf16.msra.mxu0 0
    %276 = vmatprep.subr.bf16.mxu0 0
    %277 = vmatpush2.bf16.msra.mxu0 0
    %278 = vmatprep.subr.bf16.mxu0 0
    %279 = vmatpush2.bf16.msra.mxu0 0
    %280 = vmatprep.subr.bf16.mxu0 0
    %281 = vmatpush2.bf16.msra.mxu0 0
    %282 = vmatprep.subr.bf16.mxu0 0
    %283 = vmatpush2.bf16.msra.mxu0 0
    %284 = vmatprep.subr.bf16.mxu0 0
    %285 = vmatpush2.bf16.msra.mxu0 0
    %286 = vmatprep.subr.bf16.mxu0 0
    %287 = vmatpush2.bf16.msra.mxu0 0
    %288 = vmatprep.subr.bf16.mxu0 0
    %289 = vmatpush2.bf16.msra.mxu0 0
    %290 = vmatprep.mubr.bf16.mxu0 0
    %291 = vmatmul.mubr.bf16.gmra.mxu0 %v256
    %v292 = vpop.f32.mrf.mxu0
    %v293 = vadd.f32 %v241, %v292
    %v294 = vpop.f32.mrf.mxu0
    %v295 = vpop.f32.mrf.mxu0
    %v296 = vadd.f32 %v241, %v295
    %v297 = vpop.f32.mrf.mxu0
    %298 = vdwg.mxu0
    %v299 = vld [vmem:[%s9] sm:$0x1]
    %v300 = vld [vmem:[%s10] sm:$0x1]
    %v301 = vsel %vm66, %v293, 0.0
    %302 = vadd.xlane.f32.xlu0 %v301
    %v303 = vpop.xlane.xlu0 %302
    %v304 = vsel %vm66, %v296, 0.0
    %305 = vadd.xlane.f32.xlu0 %v304
    %v306 = vpop.xlane.xlu0 %305
    %v307 = vmul.f32 %v303, %v194
    %v308 = vmul.f32 %v306, %v194
    %v309 = vsub.f32 %v293, %v307
    %v310 = vsub.f32 %v296, %v308
    %v311 = vmul.f32 %v309, %v309
    %v312 = vmul.f32 %v310, %v310
    %v313 = vsel %vm66, %v311, 0.0
    %314 = vadd.xlane.f32.xlu0 %v313
    %v315 = vpop.xlane.xlu0 %314
    %v316 = vsel %vm66, %v312, 0.0
    %317 = vadd.xlane.f32.xlu0 %v316
    %v318 = vpop.xlane.xlu0 %317
    %v319 = vmul.f32 %v315, %v194
    %v320 = vmul.f32 %v318, %v194
    %v321 = vadd.f32 %v319, 1e-05
    %v322 = vadd.f32 %v320, 1e-05
    %v323 = vrsqrt.pop %v321
    %v324 = vrsqrt.pop %v322
    %v325 = vmul.f32 %v309, %v323
    %v326 = vmul.f32 %v310, %v324
    %v328 = vlaneseq
    %v329 = vshrl.u32 %v328, 7
    %v330 = vsub.s32 0, %v329
    %v331 = vrot.slane %v299, %v330
    %v333 = vmul.f32 %v325, %v331
    %v334 = vmul.f32 %v326, %v331
    %v336 = vlaneseq
    %v337 = vshrl.u32 %v336, 7
    %v338 = vsub.s32 0, %v337
    %v339 = vrot.slane %v300, %v338
    %v341 = vadd.f32 %v333, %v339
    %v342 = vadd.f32 %v334, %v339
    %343 = vst.msk [vmem:[#allocation2] sm:$0xff] %vm66, %v341
    %344 = vst.msk [vmem:[#allocation2 + $0x8] sm:$0xff] %vm66, %v342
    // Predicated region
    $region46: #{greaselm_layer_forward.1} parent=1 // pred_check
      _
    $region47: #{greaselm_layer_forward.1} parent=1 // pred_check_branch
      %346 = sbr.rel (0) target = $region49
    $region48: #{greaselm_layer_forward.1} parent=1 // pred_region
      %s348 = ssub.s32 256, 256
      %349 = vsyncadd [#allocation3], %s348
      %s350 = sshll.u32 [#allocation2], 4
      %s351 = int_to_ptr.vmem [resolvable:$true] %s350
      %356 = dma.vmem_to_hbm [thread:$0]  %s351, 256, %s11, [#allocation3], 128, 128, 8
    $region49: #{greaselm_layer_forward.1} parent=1 // pred_fallthru
      _
    // Predicated region
    $region50: #{greaselm_layer_forward.1} parent=1 // pred_check
      _
    $region51: #{greaselm_layer_forward.1} parent=1 // pred_check_branch
      %358 = sbr.rel (0) target = $region53
    $region52: #{greaselm_layer_forward.1} parent=1 // pred_region
      %359 = dma.done [#allocation3], 256
    $region53: #{greaselm_layer_forward.1} parent=1 // pred_fallthru
      _
    %360 = vsyncpa [#allocation3], 1

</llo_original>
